<compile_context>
chip_gen: v5e
topology: v5e:2x2
jax: 0.10.0
libtpu: 0.0.40
codegen_flags: <defaults>
</compile_context>

<pallas_src>
import functools

import jax
import jax.numpy as jnp
from jax.experimental import pallas as pl
from jax.experimental.pallas import tpu as pltpu


# ----------------------------- kernels --------------------------------------


def _add_pe_kernel(x_ref, pe_ref, o_ref, *, batch):
    # x_ref: (ts, B*D), pe_ref: (ts, D). Broadcast pe over the batch lanes.
    pe_b = jnp.tile(pe_ref[...], (1, batch))
    o_ref[...] = (x_ref[...] + pe_b).astype(o_ref.dtype)


def _add_pe_dropout_mask_kernel(x_ref, pe_ref, keep_ref, o_ref, *, batch):
    # Portable dropout path: keep_ref already holds {0, 1/(1-p)} in x.dtype.
    pe_b = jnp.tile(pe_ref[...], (1, batch))
    y = x_ref[...] + pe_b
    o_ref[...] = (y * keep_ref[...]).astype(o_ref.dtype)


def _add_pe_dropout_rng_kernel(seed_ref, x_ref, pe_ref, o_ref, *, batch, p):
    # TPU-only dropout path: in-kernel HW PRNG, no extra HBM traffic.
    pe_b = jnp.tile(pe_ref[...], (1, batch))
    y = x_ref[...] + pe_b
    # Per-tile seed, decorrelated across tiles by a large odd multiplier.
    pltpu.prng_seed(seed_ref[0] + pl.program_id(0) * 1000003)
    bits = pltpu.prng_random_bits(y.shape)
    ubits = bits if bits.dtype == jnp.uint32 else pltpu.bitcast(bits, jnp.uint32)
    # keep iff u32 >= round(p * 2^32)  =>  P(keep) = 1 - p  (2^-32 granularity)
    thr = jnp.uint32(min(int(round(float(p) * (2.0 ** 32))), 2 ** 32 - 1))
    keep = ubits >= thr
    scale = jnp.asarray(1.0 / (1.0 - float(p)), dtype=y.dtype)
    zero = jnp.asarray(0.0, dtype=y.dtype)
    o_ref[...] = (y * jnp.where(keep, scale, zero)).astype(o_ref.dtype)


# ----------------------------- tiling ---------------------------------------


def _sublane(itemsize):
    # 8 rows/f32, 16 rows/bf16, 32 rows/int8-fp8 per vreg sublane group.
    return 8 * max(1, 4 // int(itemsize))


def _row_tile(rows, lanes, itemsize):
    sub = _sublane(itemsize)
    # ~2 MiB per streamed x-tile already sits near the HBM roofline and leaves
    # plenty of VMEM headroom (v7x: 64 MiB/TC) for double-buffering x/out/pe.
    tile_cap_bytes = 2 * 1024 * 1024
    row_bytes = max(1, lanes * int(itemsize))
    ts = max(1, tile_cap_bytes // row_bytes)
    # Guarantee >= 2 grid steps when rows allow it, so the "parallel" axis can
    # be split across v7x's two TensorCores (neutral on single-TC v5e/v6e).
    if rows >= 2 * sub:
        ts = min(ts, (rows + 1) // 2)
    ts = min(ts, rows)
    if ts < rows:
        ts = max(sub, (ts // sub) * sub)
    return int(ts)


# ----------------------------- wrapper ---------------------------------------


def learnable_positional_encoding(x, pe, *, p=0.1, training=False, seed=0,
                                  row_tile=None, force_pallas=False):
    """x: [S, B, D]; pe: [max_len, 1, D].  Returns [S, B, D]."""
    S, B, D = x.shape
    assert pe.shape[0] >= S and pe.shape[1] == 1 and pe.shape[2] == D
    dtype = x.dtype
    apply_dropout = bool(training) and float(p) > 0.0

    # Eval / p == 0: a trivial elementwise add.  Return plain JAX so XLA can
    # fuse it with neighbouring ops instead of paying a custom-call round trip.
    if not apply_dropout and not force_pallas:
        return (x + pe[:S].astype(dtype)).astype(dtype)

    # Lane-dense 2D view: rows = S (sublanes), lanes = B*D.  pe stays
    # un-broadcast ([S, D], cast once); the batch broadcast happens in-kernel,
    # so HBM traffic is ~2N + S*D bytes instead of ~4N.
    rows, lanes = S, B * D
    x2 = x.reshape(rows, lanes)
    pe2 = pe[:S, 0, :].astype(dtype)  # [S, D], tiny

    itemsize = jnp.dtype(dtype).itemsize
    if row_tile is not None:
        sub = _sublane(itemsize)
        ts = min(rows, int(row_tile))
        if ts < rows:
            ts = max(sub, (ts // sub) * sub)
    else:
        ts = _row_tile(rows, lanes, itemsize)

    grid = (pl.cdiv(rows, ts),)
    out_shape = jax.ShapeDtypeStruct((rows, lanes), dtype)
    compiler_params = pltpu.CompilerParams(
        dimension_semantics=("parallel",),
        vmem_limit_bytes=32 * 1024 * 1024,
    )

    on_tpu = jax.default_backend() == "tpu"

    if apply_dropout and on_tpu:
        # In-kernel HW PRNG dropout (TPU backend only).
        kernel = functools.partial(_add_pe_dropout_rng_kernel, batch=B, p=float(p))
        seed_arr = jnp.asarray([seed], dtype=jnp.int32)
        out2 = pl.pallas_call(
            kernel,
            out_shape=out_shape,
            grid_spec=pltpu.PrefetchScalarGridSpec(
                num_scalar_prefetch=1,
                grid=grid,
                in_specs=[
                    pl.BlockSpec((ts, lanes), lambda i, seed: (i, 0)),
                    pl.BlockSpec((ts, D), lambda i, seed: (i, 0)),
                ],
                out_specs=pl.BlockSpec((ts, lanes), lambda i, seed: (i, 0)),
            ),
            compiler_params=compiler_params,
        )(seed_arr, x2, pe2)
    elif apply_dropout:
        # Portable fallback (non-TPU backend / interpret): precompute the
        # inverted-dropout keep/scale values with jax.random and stream them in.
        key = jax.random.PRNGKey(int(seed))
        keep = jax.random.bernoulli(key, 1.0 - float(p), (rows, lanes))
        keep_scale = jnp.where(keep, 1.0 / (1.0 - float(p)), 0.0).astype(dtype)
        kernel = functools.partial(_add_pe_dropout_mask_kernel, batch=B)
        out2 = pl.pallas_call(
            kernel,
            out_shape=out_shape,
            grid_spec=pltpu.PrefetchScalarGridSpec(
                num_scalar_prefetch=0,
                grid=grid,
                in_specs=[
                    pl.BlockSpec((ts, lanes), lambda i: (i, 0)),
                    pl.BlockSpec((ts, D), lambda i: (i, 0)),
                    pl.BlockSpec((ts, lanes), lambda i: (i, 0)),
                ],
                out_specs=pl.BlockSpec((ts, lanes), lambda i: (i, 0)),
            ),
            compiler_params=compiler_params,
        )(x2, pe2, keep_scale)
    else:
        # force_pallas eval path (kernel add only, used for testing).
        kernel = functools.partial(_add_pe_kernel, batch=B)
        out2 = pl.pallas_call(
            kernel,
            out_shape=out_shape,
            grid_spec=pltpu.PrefetchScalarGridSpec(
                num_scalar_prefetch=0,
                grid=grid,
                in_specs=[
                    pl.BlockSpec((ts, lanes), lambda i: (i, 0)),
                    pl.BlockSpec((ts, D), lambda i: (i, 0)),
                ],
                out_specs=pl.BlockSpec((ts, lanes), lambda i: (i, 0)),
            ),
            compiler_params=compiler_params,
        )(x2, pe2)

    return out2.reshape(S, B, D)


def init_params(key, d_model, max_len=1024):
    # matches nn.init.uniform_(self.pe, -0.02, 0.02), deterministic via PRNGKey
    return jax.random.uniform(key, (max_len, 1, d_model),
                              minval=-0.02, maxval=0.02, dtype=jnp.float32)


if __name__ == "__main__":
    d_model = 32
    max_len = 1024
    seq_len = 8
    batch = 2

    key = jax.random.PRNGKey(0)
    k_pe, k_x = jax.random.split(key)

    pe = init_params(k_pe, d_model, max_len)
    x = jax.random.normal(k_x, (seq_len, batch, d_model), dtype=jnp.float32)
    ref = x + pe[:seq_len]

    # 1) Pallas kernel (add path) matches the module's eval() output exactly.
    out = learnable_positional_encoding(x, pe, p=0.1, training=False,
                                        force_pallas=True)
    out = jax.block_until_ready(out)
    assert out.shape == (seq_len, batch, d_model)
    assert out.dtype == x.dtype
    assert jnp.allclose(out, ref, atol=1e-6, rtol=1e-6)

    # 1b) eval fast path (no Pallas, XLA-fusable) matches as well.
    out_fast = jax.block_until_ready(
        learnable_positional_encoding(x, pe, p=0.1, training=False))
    assert jnp.allclose(out_fast, ref, atol=1e-6, rtol=1e-6)

    # 2) training mode: every element is either 0 (dropped) or ref/(1-p) (kept),
    #    with a keep fraction near (1-p).
    p_drop = 0.25
    out_tr = learnable_positional_encoding(x, pe, p=p_drop, training=True,
                                           seed=123)
    out_tr = jax.block_until_ready(out_tr)
    scaled = ref / (1.0 - p_drop)
    is_zero = jnp.isclose(out_tr, 0.0, atol=1e-6)
    is_scaled = jnp.isclose(out_tr, scaled, atol=1e-5, rtol=1e-5)
    assert bool(jnp.all(is_zero | is_scaled))
    keep_frac = float(jnp.mean(is_scaled.astype(jnp.float32)))
    assert 0.40 < keep_frac < 0.98, keep_frac  # loose statistical bound (n=512)

    print("KERNEL_OK")
</pallas_src>

<mosaic_0001>
module attributes {stable_mosaic.version = 11 : i64} {
  func.func @_add_pe_kernel(%arg0: i32, %arg1: memref<8x64xf32, #tpu.memory_space<vmem>>, %arg2: memref<8x32xf32, #tpu.memory_space<vmem>>, %arg3: memref<8x64xf32, #tpu.memory_space<vmem>>) attributes {dimension_semantics = [#tpu.dimension_semantics<parallel>], iteration_bounds = array<i64: 1>, scalar_prefetch = 0 : i64, scratch_operands = 0 : i64, tpu.core_type = #tpu.core_type<tc>, window_params = [{transform_indices = @transform_0, window_bounds = array<i64: 8, 64>}, {transform_indices = @transform_1, window_bounds = array<i64: 8, 32>}, {transform_indices = @transform_2, window_bounds = array<i64: 8, 64>}]} {
    %c0 = arith.constant 0 : index
    %c0_0 = arith.constant 0 : index
    %0 = vector.load %arg2[%c0, %c0_0] : memref<8x32xf32, #tpu.memory_space<vmem>>, vector<8x32xf32>
    %1 = tpu.concatenate %0, %0 in 1 : vector<8x32xf32>, vector<8x32xf32> -> vector<8x64xf32>
    %c0_1 = arith.constant 0 : index
    %c0_2 = arith.constant 0 : index
    %2 = vector.load %arg1[%c0_1, %c0_2] : memref<8x64xf32, #tpu.memory_space<vmem>>, vector<8x64xf32>
    %3 = arith.addf %2, %1 : vector<8x64xf32>
    %c0_3 = arith.constant 0 : index
    %c0_4 = arith.constant 0 : index
    %4 = vector.load %arg3[%c0_3, %c0_4] : memref<8x64xf32, #tpu.memory_space<vmem>>, vector<8x64xf32>
    tpu.vector_store %arg3[%c0_3, %c0_4], %3 {strides = array<i32>} : memref<8x64xf32, #tpu.memory_space<vmem>>, vector<8x64xf32>,
    return
  }
  func.func @transform_0(%arg0: i32) -> (i32, i32) {
    %c0_i32 = arith.constant 0 : i32
    %c0_i32_0 = arith.constant 0 : i32
    return %arg0, %c0_i32 : i32, i32
  }
  func.func @transform_1(%arg0: i32) -> (i32, i32) {
    %c0_i32 = arith.constant 0 : i32
    %c0_i32_0 = arith.constant 0 : i32
    return %arg0, %c0_i32 : i32, i32
  }
  func.func @transform_2(%arg0: i32) -> (i32, i32) {
    %c0_i32 = arith.constant 0 : i32
    %c0_i32_0 = arith.constant 0 : i32
    return %arg0, %c0_i32 : i32, i32
  }
}

</mosaic_0001>

<llo_original>
// kernel: tpu_custom_call.1
$region0: #{tpu_custom_call.1}
  #allocation0 [shape = 'u32[]', space=smem, size = 0x4, offset = 0x4, fixed_abs, tag = 'smem constant byte address 0x4 - core index']
  #allocation1 [shape = 'u32[72,128]{1,0:T(1,128)}', space=vmem, size = 0x9000, scoped, tag = 'internal scratch']
  %s0 = inlined_call_operand.hbm [shape: f32[8,64], index: 0, kind: input, shape index: {}]
  %s1 = inlined_call_operand.hbm [shape: f32[8,32], index: 1, kind: input, shape index: {}]
  %s2 = inlined_call_operand.hbm [shape: f32[8,64], index: 2, kind: output, shape index: {}]
  %s3 = sld [smem:[#allocation0]]
  $region26: #{tpu_custom_call.1} parent=0
    _
  %s5 = ssub.s32 1, %s3
  %s6 = scalar_select 0, %s5, %s3
  $region1: #{tpu_custom_call.1} parent=0
    #allocation2 [shape = 'u8[4096]{0}', space=vmem, size = 0x1000, scoped, tag = 'input window, operand 0, single buffered']
    #allocation3 [shape = 's32[1]{0}', space=sflag, size = 0x4, scoped, tag = 'scoped memory for tpu_custom_call.1']
    #allocation4 [shape = 's32[1]{0}', space=sflag, size = 0x4, scoped, tag = 'scoped memory for tpu_custom_call.1']
    #allocation5 [shape = 'u8[4096]{0}', space=vmem, size = 0x1000, scoped, tag = 'input window, operand 1, single buffered']
    #allocation6 [shape = 's32[1]{0}', space=sflag, size = 0x4, scoped, tag = 'scoped memory for tpu_custom_call.1']
    #allocation7 [shape = 'u8[4096]{0}', space=vmem, size = 0x1000, scoped, tag = 'output window, operand 0, single buffered']
    %7 = vsyncpa [#allocation3], 0
    %8 = vsyncpa [#allocation6], 0
    %9 = vsyncpa [#allocation4], 0
    // Predicated region
    $region2: #{tpu_custom_call.1} parent=1 // pred_check
      _
    $region3: #{tpu_custom_call.1} parent=1 // pred_check_branch
      %11 = sbr.rel (0) target = $region5
    $region4: #{tpu_custom_call.1} parent=1 // pred_region
      %13 = vsyncadd [#allocation3], 0
      %s15 = sshll.u32 %s0, 4
      %s16 = int_to_ptr.hbm [resolvable:$true] %s15
      %s17 = sshll.u32 [#allocation2], 4
      %s18 = int_to_ptr.vmem [resolvable:$true] %s17
      %20 = dma.hbm_to_vmem [thread:$0]  %s16, 128, %s18, [#allocation3]
    $region5: #{tpu_custom_call.1} parent=1 // pred_fallthru
      _
    // Predicated region
    $region6: #{tpu_custom_call.1} parent=1 // pred_check
      _
    $region7: #{tpu_custom_call.1} parent=1 // pred_check_branch
      %22 = sbr.rel (0) target = $region9
    $region8: #{tpu_custom_call.1} parent=1 // pred_region
      %24 = vsyncadd [#allocation6], 0
      %s26 = sshll.u32 %s1, 4
      %s27 = int_to_ptr.hbm [resolvable:$true] %s26
      %s28 = sshll.u32 [#allocation5], 4
      %s29 = int_to_ptr.vmem [resolvable:$true] %s28
      %31 = dma.hbm_to_vmem [thread:$0]  %s27, 128, %s29, [#allocation6]
    $region9: #{tpu_custom_call.1} parent=1 // pred_fallthru
      _
    // Predicated region
    $region10: #{tpu_custom_call.1} parent=1 // pred_check
      _
    $region11: #{tpu_custom_call.1} parent=1 // pred_check_branch
      %33 = sbr.rel (0) target = $region13
    $region12: #{tpu_custom_call.1} parent=1 // pred_region
      %35 = dma.done [#allocation3], 128
    $region13: #{tpu_custom_call.1} parent=1 // pred_fallthru
      _
    // Predicated region
    $region14: #{tpu_custom_call.1} parent=1 // pred_check
      _
    $region15: #{tpu_custom_call.1} parent=1 // pred_check_branch
      %37 = sbr.rel (0) target = $region17
    $region16: #{tpu_custom_call.1} parent=1 // pred_region
      %39 = dma.done [#allocation6], 128
    $region17: #{tpu_custom_call.1} parent=1 // pred_fallthru
      _
    %v40 = vld [vmem:[#allocation5] sm:$0xff]
    %42 = vrot.lane.b32.xlu0 %v40, 32
    %v43 = vpop.permute.xlu0 %42
    %vm45 = vcmask 261120
    %v46 = vsel %vm45, %v40, %v43
    %v47 = vld [vmem:[#allocation2] sm:$0xff]
    %v48 = vadd.f32 %v47, %v46
    %vm49 = vcmask 523264
    %50 = vst.msk [vmem:[#allocation7] sm:$0xff] %vm49, %v48
    // Predicated region
    $region18: #{tpu_custom_call.1} parent=1 // pred_check
      _
    $region19: #{tpu_custom_call.1} parent=1 // pred_check_branch
      %52 = sbr.rel (0) target = $region21
    $region20: #{tpu_custom_call.1} parent=1 // pred_region
      %54 = vsyncadd [#allocation4], 0
      %s56 = sshll.u32 [#allocation7], 4
      %s57 = int_to_ptr.vmem [resolvable:$true] %s56
      %s58 = sshll.u32 %s2, 4
      %s59 = int_to_ptr.hbm [resolvable:$true] %s58
      %61 = dma.vmem_to_hbm [thread:$0]  %s57, 128, %s59, [#allocation4]
    $region21: #{tpu_custom_call.1} parent=1 // pred_fallthru
      _
    // Predicated region
    $region22: #{tpu_custom_call.1} parent=1 // pred_check
      _
    $region23: #{tpu_custom_call.1} parent=1 // pred_check_branch
      %63 = sbr.rel (0) target = $region25
    $region24: #{tpu_custom_call.1} parent=1 // pred_region
      %65 = dma.done [#allocation4], 128
    $region25: #{tpu_custom_call.1} parent=1 // pred_fallthru
      _
    %66 = vsyncpa [#allocation3], 1
    %67 = vsyncpa [#allocation6], 1
    %68 = vsyncpa [#allocation4], 1

</llo_original>
